<compile_context>
chip_gen: v7x
topology: tpu7x:2x2x1
jax: 0.10.0
libtpu: 0.0.40
codegen_flags: <defaults>
</compile_context>

<pallas_src>
import functools
import math

import jax
import jax.numpy as jnp
from jax.experimental import pallas as pl
from jax.experimental.pallas import tpu as pltpu


def _bn_lrelu(y, gamma, beta, eps, slope):
    """Training-mode BatchNorm1d over the C axis + LeakyReLU(slope).

    y: (B, C, F); stats are per-C over (B, F) (one-pass sum / sum-of-squares,
    biased variance); gamma/beta: (1, C, 1)."""
    n = y.shape[0] * y.shape[2]
    s = jnp.sum(y, axis=(0, 2), keepdims=True)          # (1, C, 1)
    ss = jnp.sum(y * y, axis=(0, 2), keepdims=True)     # (1, C, 1)
    mean = s * (1.0 / n)
    var = ss * (1.0 / n) - mean * mean                  # biased batch variance
    yn = (y - mean) * jax.lax.rsqrt(var + eps)
    yn = yn * gamma + beta
    return jnp.where(yn >= 0.0, yn, slope * yn)


def _block_kernel(xu_ref, w1_ref, g1_ref, b1_ref, w2_ref, g2_ref, b2_ref,
                  out_ref, y1pad_ref, *, B, C, F, K, pad, eps, slope):
    """Whole `block` forward fused into one kernel.

    xu_ref   : (B*C, K*D)        im2col patches of x (layer-1 conv operand)
    w1_ref   : (K*D, F)          layer-1 conv weight, tap-major rows
    g1/b1    : (1, C, 1)         layer-1 BN affine params
    w2_ref   : (K*F, F)          layer-2 conv weight, tap-major rows
    g2/b2    : (1, C, 1)         layer-2 BN affine params
    out_ref  : (B, C*F)          lane-dense output (reshaped by wrapper)
    y1pad_ref: (B, C+2*pad, F)   VMEM scratch: zero-padded layer-1 activation
    """
    # ---------------- layer 1: conv as ONE MXU matmul ------------------------
    y1 = jnp.dot(xu_ref[...], w1_ref[...], preferred_element_type=jnp.float32)
    a1 = _bn_lrelu(y1.reshape(B, C, F), g1_ref[...], b1_ref[...], eps, slope)

    # ------------- inter-layer zero padding, entirely in VMEM ----------------
    y1pad_ref[...] = jnp.zeros(y1pad_ref.shape, y1pad_ref.dtype)
    y1pad_ref[:, pad:pad + C, :] = a1

    # ------- layer 2: unfold K shifted windows along lanes -> ONE matmul -----
    x2u = jnp.concatenate(
        [y1pad_ref[:, t:t + C, :].reshape(B * C, F) for t in range(K)],
        axis=-1)                                         # (B*C, K*F)
    y2 = jnp.dot(x2u, w2_ref[...], preferred_element_type=jnp.float32)
    a2 = _bn_lrelu(y2.reshape(B, C, F), g2_ref[...], b2_ref[...], eps, slope)

    # ------- lane-dense store: (B, C*F), last dim multiple of 128 ------------
    out_ref[...] = jnp.concatenate([a2[:, c, :] for c in range(C)], axis=-1)


def block_forward(x, params, kernel):
    """block.forward for x: (B, C, D), params in PyTorch layout."""
    B, C, D = x.shape
    F = params["w1"].shape[0]
    K = kernel
    pad = math.ceil((K - 1) / 2)

    xf = x.astype(jnp.float32)
    # im2col patches for layer 1: xu[b*C + c, t*D + d] = xpad[b, c + t, d].
    # (For even K, PyTorch emits C+1 outputs and drops the last; computing
    #  windows 0..C-1 here is equivalent.)
    xpad = jnp.pad(xf, ((0, 0), (pad, pad), (0, 0)))
    xu = jnp.concatenate([xpad[:, t:t + C, :] for t in range(K)],
                         axis=-1).reshape(B * C, K * D)

    # Conv weights: PyTorch (F_out, D_in, K) -> (K*D_in, F_out), tap-major rows.
    w1u = jnp.transpose(params["w1"].astype(jnp.float32), (2, 1, 0)).reshape(K * D, F)
    w2u = jnp.transpose(params["w2"].astype(jnp.float32), (2, 1, 0)).reshape(K * F, F)

    g1 = params["gamma1"].astype(jnp.float32).reshape(1, C, 1)
    b1 = params["beta1"].astype(jnp.float32).reshape(1, C, 1)
    g2 = params["gamma2"].astype(jnp.float32).reshape(1, C, 1)
    b2 = params["beta2"].astype(jnp.float32).reshape(1, C, 1)

    kern = functools.partial(_block_kernel, B=B, C=C, F=F, K=K, pad=pad,
                             eps=1e-5, slope=0.2)

    out2d = pl.pallas_call(
        kern,
        out_shape=jax.ShapeDtypeStruct((B, C * F), jnp.float32),
        grid=(1,),
        in_specs=[
            pl.BlockSpec(xu.shape, lambda i: (0, 0)),
            pl.BlockSpec(w1u.shape, lambda i: (0, 0)),
            pl.BlockSpec(g1.shape, lambda i: (0, 0, 0)),
            pl.BlockSpec(b1.shape, lambda i: (0, 0, 0)),
            pl.BlockSpec(w2u.shape, lambda i: (0, 0)),
            pl.BlockSpec(g2.shape, lambda i: (0, 0, 0)),
            pl.BlockSpec(b2.shape, lambda i: (0, 0, 0)),
        ],
        out_specs=pl.BlockSpec((B, C * F), lambda i: (0, 0)),
        scratch_shapes=[pltpu.VMEM((B, C + 2 * pad, F), jnp.float32)],
        compiler_params=pltpu.CompilerParams(
            dimension_semantics=("arbitrary",)),
    )(xu, w1u, g1, b1, w2u, g2, b2)

    return out2d.reshape(B, C, F)


# ----------------------- pure-JAX reference (for checking) -----------------------
def _c1d_ref(x, w, gamma, beta, kernel):
    B, C, D = x.shape
    F_ = w.shape[0]
    pad = math.ceil((kernel - 1) / 2)
    xpad = jnp.pad(x, ((0, 0), (pad, pad), (0, 0)))
    out = jnp.zeros((B, C, F_), jnp.float32)
    for t in range(kernel):
        out = out + jnp.einsum("bcd,fd->bcf", xpad[:, t:t + C, :], w[:, :, t])
    mean = jnp.mean(out, axis=(0, 2), keepdims=True)
    var = jnp.mean((out - mean) ** 2, axis=(0, 2), keepdims=True)
    out = (out - mean) / jnp.sqrt(var + 1e-5)
    out = out * gamma.reshape(1, C, 1) + beta.reshape(1, C, 1)
    return jnp.where(out >= 0, out, 0.2 * out)


def _block_ref(x, params, kernel):
    y = _c1d_ref(x, params["w1"], params["gamma1"], params["beta1"], kernel)
    return _c1d_ref(y, params["w2"], params["gamma2"], params["beta2"], kernel)


if __name__ == "__main__":
    # block(input_channels=8, input_dims=4, filters=32, kernel=3), batch=2
    B, C, D, F_, K = 2, 8, 4, 32, 3

    key = jax.random.PRNGKey(0)
    kx, kw1, kw2, kg1, kb1, kg2, kb2 = jax.random.split(key, 7)

    x = jax.random.normal(kx, (B, C, D), dtype=jnp.float32)
    params = {
        # Conv1d weights in PyTorch layout (out_channels, in_channels, kernel)
        "w1": jax.random.normal(kw1, (F_, D, K), dtype=jnp.float32) * 0.2,
        "w2": jax.random.normal(kw2, (F_, F_, K), dtype=jnp.float32) * 0.1,
        # BatchNorm1d(num_features=C) affine params, made non-trivial
        "gamma1": 1.0 + 0.1 * jax.random.normal(kg1, (C,), dtype=jnp.float32),
        "beta1": 0.1 * jax.random.normal(kb1, (C,), dtype=jnp.float32),
        "gamma2": 1.0 + 0.1 * jax.random.normal(kg2, (C,), dtype=jnp.float32),
        "beta2": 0.1 * jax.random.normal(kb2, (C,), dtype=jnp.float32),
    }

    out = jax.block_until_ready(block_forward(x, params, K))
    ref = jax.block_until_ready(_block_ref(x, params, K))

    assert out.shape == (B, C, F_)
    assert jnp.allclose(out, ref, atol=2e-4, rtol=2e-4), "mismatch vs JAX reference"

    print("KERNEL_OK")
</pallas_src>

<mosaic_0001>
module attributes {stable_mosaic.version = 11 : i64} {
  func.func @_block_kernel(%arg0: i32, %arg1: memref<16x12xf32, #tpu.memory_space<vmem>>, %arg2: memref<12x32xf32, #tpu.memory_space<vmem>>, %arg3: memref<1x8x1xf32, #tpu.memory_space<vmem>>, %arg4: memref<1x8x1xf32, #tpu.memory_space<vmem>>, %arg5: memref<96x32xf32, #tpu.memory_space<vmem>>, %arg6: memref<1x8x1xf32, #tpu.memory_space<vmem>>, %arg7: memref<1x8x1xf32, #tpu.memory_space<vmem>>, %arg8: memref<2x256xf32, #tpu.memory_space<vmem>>, %arg9: memref<2x10x32xf32, #tpu.memory_space<vmem>>) attributes {dimension_semantics = [#tpu.dimension_semantics<arbitrary>], iteration_bounds = array<i64: 1>, scalar_prefetch = 0 : i64, scratch_operands = 1 : i64, tpu.core_type = #tpu.core_type<tc>, window_params = [{pipeline_mode = #tpu.pipeline_mode<synchronous>, transform_indices = @transform_0, window_bounds = array<i64: 16, 12>}, {pipeline_mode = #tpu.pipeline_mode<synchronous>, transform_indices = @transform_1, window_bounds = array<i64: 12, 32>}, {pipeline_mode = #tpu.pipeline_mode<synchronous>, transform_indices = @transform_2, window_bounds = array<i64: 1, 8, 1>}, {pipeline_mode = #tpu.pipeline_mode<synchronous>, transform_indices = @transform_3, window_bounds = array<i64: 1, 8, 1>}, {pipeline_mode = #tpu.pipeline_mode<synchronous>, transform_indices = @transform_4, window_bounds = array<i64: 96, 32>}, {pipeline_mode = #tpu.pipeline_mode<synchronous>, transform_indices = @transform_5, window_bounds = array<i64: 1, 8, 1>}, {pipeline_mode = #tpu.pipeline_mode<synchronous>, transform_indices = @transform_6, window_bounds = array<i64: 1, 8, 1>}, {pipeline_mode = #tpu.pipeline_mode<synchronous>, transform_indices = @transform_7, window_bounds = array<i64: 2, 256>}]} {
    %c0 = arith.constant 0 : index
    %c0_0 = arith.constant 0 : index
    %0 = vector.load %arg1[%c0, %c0_0] : memref<16x12xf32, #tpu.memory_space<vmem>>, vector<16x12xf32>
    %c0_1 = arith.constant 0 : index
    %c0_2 = arith.constant 0 : index
    %1 = vector.load %arg2[%c0_1, %c0_2] : memref<12x32xf32, #tpu.memory_space<vmem>>, vector<12x32xf32>
    %cst = arith.constant dense<0.000000e+00> : vector<16x32xf32>
    %2 = tpu.matmul %0, %1, %cst {dimension_numbers = #tpu.dot_dimension_numbers<[1], [0], [0], [1], [0, 0, 1, 1], [], []>} : vector<16x12xf32>, vector<12x32xf32>, vector<16x32xf32> -> vector<16x32xf32>
    %3 = vector.shape_cast %2 : vector<16x32xf32> to vector<2x8x32xf32>
    %c0_3 = arith.constant 0 : index
    %c0_4 = arith.constant 0 : index
    %c0_5 = arith.constant 0 : index
    %4 = vector.load %arg3[%c0_3, %c0_4, %c0_5] : memref<1x8x1xf32, #tpu.memory_space<vmem>>, vector<1x8x1xf32>
    %c0_6 = arith.constant 0 : index
    %c0_7 = arith.constant 0 : index
    %c0_8 = arith.constant 0 : index
    %5 = vector.load %arg4[%c0_6, %c0_7, %c0_8] : memref<1x8x1xf32, #tpu.memory_space<vmem>>, vector<1x8x1xf32>
    %cst_9 = arith.constant dense<0.000000e+00> : vector<8xf32>
    %6 = vector.multi_reduction <add>, %3, %cst_9 [0, 2] : vector<2x8x32xf32> to vector<8xf32>
    %7 = vector.shape_cast %6 : vector<8xf32> to vector<1x8x1xf32>
    %8 = arith.mulf %3, %3 : vector<2x8x32xf32>
    %cst_10 = arith.constant dense<0.000000e+00> : vector<8xf32>
    %9 = vector.multi_reduction <add>, %8, %cst_10 [0, 2] : vector<2x8x32xf32> to vector<8xf32>
    %10 = vector.shape_cast %9 : vector<8xf32> to vector<1x8x1xf32>
    %cst_11 = arith.constant 1.562500e-02 : f32
    %11 = vector.broadcast %cst_11 : f32 to vector<1x8x1xf32>
    %12 = arith.mulf %7, %11 : vector<1x8x1xf32>
    %cst_12 = arith.constant 1.562500e-02 : f32
    %13 = vector.broadcast %cst_12 : f32 to vector<1x8x1xf32>
    %14 = arith.mulf %10, %13 : vector<1x8x1xf32>
    %15 = arith.mulf %12, %12 : vector<1x8x1xf32>
    %16 = arith.subf %14, %15 : vector<1x8x1xf32>
    %17 = vector.broadcast %12 : vector<1x8x1xf32> to vector<2x8x32xf32>
    %18 = arith.subf %3, %17 : vector<2x8x32xf32>
    %cst_13 = arith.constant 9.99999974E-6 : f32
    %19 = vector.broadcast %cst_13 : f32 to vector<1x8x1xf32>
    %20 = arith.addf %16, %19 : vector<1x8x1xf32>
    %21 = math.rsqrt %20 : vector<1x8x1xf32>
    %22 = vector.broadcast %21 : vector<1x8x1xf32> to vector<2x8x32xf32>
    %23 = arith.mulf %18, %22 : vector<2x8x32xf32>
    %24 = vector.broadcast %4 : vector<1x8x1xf32> to vector<2x8x32xf32>
    %25 = arith.mulf %23, %24 : vector<2x8x32xf32>
    %26 = vector.broadcast %5 : vector<1x8x1xf32> to vector<2x8x32xf32>
    %27 = arith.addf %25, %26 : vector<2x8x32xf32>
    %cst_14 = arith.constant 0.000000e+00 : f32
    %28 = vector.broadcast %cst_14 : f32 to vector<2x8x32xf32>
    %29 = arith.cmpf oge, %27, %28 : vector<2x8x32xf32>
    %cst_15 = arith.constant 2.000000e-01 : f32
    %30 = vector.broadcast %cst_15 : f32 to vector<2x8x32xf32>
    %31 = arith.mulf %30, %27 : vector<2x8x32xf32>
    %32 = arith.select %29, %27, %31 : vector<2x8x32xi1>, vector<2x8x32xf32>
    %cst_16 = arith.constant 0.000000e+00 : f32
    %33 = vector.broadcast %cst_16 : f32 to vector<2x10x32xf32>
    %c0_17 = arith.constant 0 : index
    %c0_18 = arith.constant 0 : index
    %c0_19 = arith.constant 0 : index
    %34 = vector.load %arg9[%c0_17, %c0_18, %c0_19] : memref<2x10x32xf32, #tpu.memory_space<vmem>>, vector<2x10x32xf32>
    tpu.vector_store %arg9[%c0_17, %c0_18, %c0_19], %33 {strides = array<i32>} : memref<2x10x32xf32, #tpu.memory_space<vmem>>, vector<2x10x32xf32>,
    %c0_20 = arith.constant 0 : index
    %c1 = arith.constant 1 : index
    %c0_21 = arith.constant 0 : index
    %35 = vector.load %arg9[%c0_20, %c1, %c0_21] : memref<2x10x32xf32, #tpu.memory_space<vmem>>, vector<2x8x32xf32>
    tpu.vector_store %arg9[%c0_20, %c1, %c0_21], %32 {strides = array<i32>} : memref<2x10x32xf32, #tpu.memory_space<vmem>>, vector<2x8x32xf32>,
    %c0_22 = arith.constant 0 : index
    %c0_23 = arith.constant 0 : index
    %c0_24 = arith.constant 0 : index
    %36 = vector.load %arg9[%c0_22, %c0_23, %c0_24] : memref<2x10x32xf32, #tpu.memory_space<vmem>>, vector<2x8x32xf32>
    %37 = vector.shape_cast %36 : vector<2x8x32xf32> to vector<16x32xf32>
    %c0_25 = arith.constant 0 : index
    %c1_26 = arith.constant 1 : index
    %c0_27 = arith.constant 0 : index
    %38 = vector.load %arg9[%c0_25, %c1_26, %c0_27] : memref<2x10x32xf32, #tpu.memory_space<vmem>>, vector<2x8x32xf32>
    %39 = vector.shape_cast %38 : vector<2x8x32xf32> to vector<16x32xf32>
    %c0_28 = arith.constant 0 : index
    %c2 = arith.constant 2 : index
    %c0_29 = arith.constant 0 : index
    %40 = vector.load %arg9[%c0_28, %c2, %c0_29] : memref<2x10x32xf32, #tpu.memory_space<vmem>>, vector<2x8x32xf32>
    %41 = vector.shape_cast %40 : vector<2x8x32xf32> to vector<16x32xf32>
    %42 = tpu.concatenate %37, %39, %41 in 1 : vector<16x32xf32>, vector<16x32xf32>, vector<16x32xf32> -> vector<16x96xf32>
    %c0_30 = arith.constant 0 : index
    %c0_31 = arith.constant 0 : index
    %43 = vector.load %arg5[%c0_30, %c0_31] : memref<96x32xf32, #tpu.memory_space<vmem>>, vector<96x32xf32>
    %cst_32 = arith.constant dense<0.000000e+00> : vector<16x32xf32>
    %44 = tpu.matmul %42, %43, %cst_32 {dimension_numbers = #tpu.dot_dimension_numbers<[1], [0], [0], [1], [0, 0, 1, 1], [], []>} : vector<16x96xf32>, vector<96x32xf32>, vector<16x32xf32> -> vector<16x32xf32>
    %45 = vector.shape_cast %44 : vector<16x32xf32> to vector<2x8x32xf32>
    %c0_33 = arith.constant 0 : index
    %c0_34 = arith.constant 0 : index
    %c0_35 = arith.constant 0 : index
    %46 = vector.load %arg6[%c0_33, %c0_34, %c0_35] : memref<1x8x1xf32, #tpu.memory_space<vmem>>, vector<1x8x1xf32>
    %c0_36 = arith.constant 0 : index
    %c0_37 = arith.constant 0 : index
    %c0_38 = arith.constant 0 : index
    %47 = vector.load %arg7[%c0_36, %c0_37, %c0_38] : memref<1x8x1xf32, #tpu.memory_space<vmem>>, vector<1x8x1xf32>
    %cst_39 = arith.constant dense<0.000000e+00> : vector<8xf32>
    %48 = vector.multi_reduction <add>, %45, %cst_39 [0, 2] : vector<2x8x32xf32> to vector<8xf32>
    %49 = vector.shape_cast %48 : vector<8xf32> to vector<1x8x1xf32>
    %50 = arith.mulf %45, %45 : vector<2x8x32xf32>
    %cst_40 = arith.constant dense<0.000000e+00> : vector<8xf32>
    %51 = vector.multi_reduction <add>, %50, %cst_40 [0, 2] : vector<2x8x32xf32> to vector<8xf32>
    %52 = vector.shape_cast %51 : vector<8xf32> to vector<1x8x1xf32>
    %cst_41 = arith.constant 1.562500e-02 : f32
    %53 = vector.broadcast %cst_41 : f32 to vector<1x8x1xf32>
    %54 = arith.mulf %49, %53 : vector<1x8x1xf32>
    %cst_42 = arith.constant 1.562500e-02 : f32
    %55 = vector.broadcast %cst_42 : f32 to vector<1x8x1xf32>
    %56 = arith.mulf %52, %55 : vector<1x8x1xf32>
    %57 = arith.mulf %54, %54 : vector<1x8x1xf32>
    %58 = arith.subf %56, %57 : vector<1x8x1xf32>
    %59 = vector.broadcast %54 : vector<1x8x1xf32> to vector<2x8x32xf32>
    %60 = arith.subf %45, %59 : vector<2x8x32xf32>
    %cst_43 = arith.constant 9.99999974E-6 : f32
    %61 = vector.broadcast %cst_43 : f32 to vector<1x8x1xf32>
    %62 = arith.addf %58, %61 : vector<1x8x1xf32>
    %63 = math.rsqrt %62 : vector<1x8x1xf32>
    %64 = vector.broadcast %63 : vector<1x8x1xf32> to vector<2x8x32xf32>
    %65 = arith.mulf %60, %64 : vector<2x8x32xf32>
    %66 = vector.broadcast %46 : vector<1x8x1xf32> to vector<2x8x32xf32>
    %67 = arith.mulf %65, %66 : vector<2x8x32xf32>
    %68 = vector.broadcast %47 : vector<1x8x1xf32> to vector<2x8x32xf32>
    %69 = arith.addf %67, %68 : vector<2x8x32xf32>
    %cst_44 = arith.constant 0.000000e+00 : f32
    %70 = vector.broadcast %cst_44 : f32 to vector<2x8x32xf32>
    %71 = arith.cmpf oge, %69, %70 : vector<2x8x32xf32>
    %cst_45 = arith.constant 2.000000e-01 : f32
    %72 = vector.broadcast %cst_45 : f32 to vector<2x8x32xf32>
    %73 = arith.mulf %72, %69 : vector<2x8x32xf32>
    %74 = arith.select %71, %69, %73 : vector<2x8x32xi1>, vector<2x8x32xf32>
    %75 = vector.extract_strided_slice %74 {offsets = [0, 0, 0], sizes = [2, 1, 32], strides = [1, 1, 1]} : vector<2x8x32xf32> to vector<2x1x32xf32>
    %76 = vector.shape_cast %75 : vector<2x1x32xf32> to vector<2x32xf32>
    %77 = vector.extract_strided_slice %74 {offsets = [0, 1, 0], sizes = [2, 1, 32], strides = [1, 1, 1]} : vector<2x8x32xf32> to vector<2x1x32xf32>
    %78 = vector.shape_cast %77 : vector<2x1x32xf32> to vector<2x32xf32>
    %79 = vector.extract_strided_slice %74 {offsets = [0, 2, 0], sizes = [2, 1, 32], strides = [1, 1, 1]} : vector<2x8x32xf32> to vector<2x1x32xf32>
    %80 = vector.shape_cast %79 : vector<2x1x32xf32> to vector<2x32xf32>
    %81 = vector.extract_strided_slice %74 {offsets = [0, 3, 0], sizes = [2, 1, 32], strides = [1, 1, 1]} : vector<2x8x32xf32> to vector<2x1x32xf32>
    %82 = vector.shape_cast %81 : vector<2x1x32xf32> to vector<2x32xf32>
    %83 = vector.extract_strided_slice %74 {offsets = [0, 4, 0], sizes = [2, 1, 32], strides = [1, 1, 1]} : vector<2x8x32xf32> to vector<2x1x32xf32>
    %84 = vector.shape_cast %83 : vector<2x1x32xf32> to vector<2x32xf32>
    %85 = vector.extract_strided_slice %74 {offsets = [0, 5, 0], sizes = [2, 1, 32], strides = [1, 1, 1]} : vector<2x8x32xf32> to vector<2x1x32xf32>
    %86 = vector.shape_cast %85 : vector<2x1x32xf32> to vector<2x32xf32>
    %87 = vector.extract_strided_slice %74 {offsets = [0, 6, 0], sizes = [2, 1, 32], strides = [1, 1, 1]} : vector<2x8x32xf32> to vector<2x1x32xf32>
    %88 = vector.shape_cast %87 : vector<2x1x32xf32> to vector<2x32xf32>
    %89 = vector.extract_strided_slice %74 {offsets = [0, 7, 0], sizes = [2, 1, 32], strides = [1, 1, 1]} : vector<2x8x32xf32> to vector<2x1x32xf32>
    %90 = vector.shape_cast %89 : vector<2x1x32xf32> to vector<2x32xf32>
    %91 = tpu.concatenate %76, %78, %80, %82, %84, %86, %88, %90 in 1 : vector<2x32xf32>, vector<2x32xf32>, vector<2x32xf32>, vector<2x32xf32>, vector<2x32xf32>, vector<2x32xf32>, vector<2x32xf32>, vector<2x32xf32> -> vector<2x256xf32>
    %c0_46 = arith.constant 0 : index
    %c0_47 = arith.constant 0 : index
    %92 = vector.load %arg8[%c0_46, %c0_47] : memref<2x256xf32, #tpu.memory_space<vmem>>, vector<2x256xf32>
    tpu.vector_store %arg8[%c0_46, %c0_47], %91 {strides = array<i32>} : memref<2x256xf32, #tpu.memory_space<vmem>>, vector<2x256xf32>,
    return
  }
  func.func @transform_0(%arg0: i32) -> (i32, i32) {
    %c0_i32 = arith.constant 0 : i32
    %c0_i32_0 = arith.constant 0 : i32
    %c0_i32_1 = arith.constant 0 : i32
    return %c0_i32, %c0_i32_0 : i32, i32
  }
  func.func @transform_1(%arg0: i32) -> (i32, i32) {
    %c0_i32 = arith.constant 0 : i32
    %c0_i32_0 = arith.constant 0 : i32
    %c0_i32_1 = arith.constant 0 : i32
    return %c0_i32, %c0_i32_0 : i32, i32
  }
  func.func @transform_2(%arg0: i32) -> (i32, i32, i32) {
    %c0_i32 = arith.constant 0 : i32
    %c0_i32_0 = arith.constant 0 : i32
    %c0_i32_1 = arith.constant 0 : i32
    %c0_i32_2 = arith.constant 0 : i32
    return %c0_i32, %c0_i32_0, %c0_i32_1 : i32, i32, i32
  }
  func.func @transform_3(%arg0: i32) -> (i32, i32, i32) {
    %c0_i32 = arith.constant 0 : i32
    %c0_i32_0 = arith.constant 0 : i32
    %c0_i32_1 = arith.constant 0 : i32
    %c0_i32_2 = arith.constant 0 : i32
    return %c0_i32, %c0_i32_0, %c0_i32_1 : i32, i32, i32
  }
  func.func @transform_4(%arg0: i32) -> (i32, i32) {
    %c0_i32 = arith.constant 0 : i32
    %c0_i32_0 = arith.constant 0 : i32
    %c0_i32_1 = arith.constant 0 : i32
    return %c0_i32, %c0_i32_0 : i32, i32
  }
  func.func @transform_5(%arg0: i32) -> (i32, i32, i32) {
    %c0_i32 = arith.constant 0 : i32
    %c0_i32_0 = arith.constant 0 : i32
    %c0_i32_1 = arith.constant 0 : i32
    %c0_i32_2 = arith.constant 0 : i32
    return %c0_i32, %c0_i32_0, %c0_i32_1 : i32, i32, i32
  }
  func.func @transform_6(%arg0: i32) -> (i32, i32, i32) {
    %c0_i32 = arith.constant 0 : i32
    %c0_i32_0 = arith.constant 0 : i32
    %c0_i32_1 = arith.constant 0 : i32
    %c0_i32_2 = arith.constant 0 : i32
    return %c0_i32, %c0_i32_0, %c0_i32_1 : i32, i32, i32
  }
  func.func @transform_7(%arg0: i32) -> (i32, i32) {
    %c0_i32 = arith.constant 0 : i32
    %c0_i32_0 = arith.constant 0 : i32
    %c0_i32_1 = arith.constant 0 : i32
    return %c0_i32, %c0_i32_0 : i32, i32
  }
}

</mosaic_0001>

<llo_original>
// kernel: tpu_custom_call.1
$region0: #{tpu_custom_call.1}
  #allocation0 [shape = 'u32[]', space=smem, size = 0x4, offset = 0x4, fixed_abs, tag = 'smem constant byte address 0x4 - core index']
  #allocation1 [shape = 'u32[144,128]{1,0:T(1,128)}', space=vmem, size = 0x12000, scoped, tag = 'internal scratch']
  #allocation2 [shape = 'f32[2,10,32]{2,1,0:T(8,128)}', space=vmem, size = 0x4000, scoped, tag = 'scratch operand']
  %s0 = inlined_call_operand.vmem [shape: f32[16,12], index: 0, kind: input, shape index: {}]
  %s1 = inlined_call_operand.vmem [shape: f32[12,32], index: 1, kind: input, shape index: {}]
  %s2 = inlined_call_operand.vmem [shape: f32[1,8,1], index: 2, kind: input, shape index: {}]
  %s3 = inlined_call_operand.vmem [shape: f32[1,8,1], index: 3, kind: input, shape index: {}]
  %s4 = inlined_call_operand.vmem [shape: f32[96,32], index: 4, kind: input, shape index: {}]
  %s5 = inlined_call_operand.vmem [shape: f32[1,8,1], index: 5, kind: input, shape index: {}]
  %s6 = inlined_call_operand.vmem [shape: f32[1,8,1], index: 6, kind: input, shape index: {}]
  %s7 = inlined_call_operand.hbm [shape: f32[2,256], index: 7, kind: output, shape index: {}]
  %s8 = sld [smem:[#allocation0]]
  $region38: #{tpu_custom_call.1} parent=0
    _
  %s10 = ssub.s32 1, %s8
  %s11 = scalar_select 0, %s10, %s8
  $region1: #{tpu_custom_call.1} parent=0
    #allocation3 [shape = 'u8[2048]{0}', space=vmem, size = 0x800, scoped, tag = 'output window, operand 0, single buffered']
    #allocation4 [shape = 's32[1]{0}', space=sflag, size = 0x4, scoped, tag = 'scoped memory for tpu_custom_call.1']
    %12 = vsyncpa [#allocation4], 0
    // Predicated region
    $region2: #{tpu_custom_call.1} parent=1 // pred_check
      _
    $region3: #{tpu_custom_call.1} parent=1 // pred_check_branch
      %14 = sbr.rel (0) target = $region5
    $region4: #{tpu_custom_call.1} parent=1 // pred_region
      _
    $region5: #{tpu_custom_call.1} parent=1 // pred_fallthru
      _
    // Predicated region
    $region6: #{tpu_custom_call.1} parent=1 // pred_check
      _
    $region7: #{tpu_custom_call.1} parent=1 // pred_check_branch
      %16 = sbr.rel (0) target = $region9
    $region8: #{tpu_custom_call.1} parent=1 // pred_region
      _
    $region9: #{tpu_custom_call.1} parent=1 // pred_fallthru
      _
    // Predicated region
    $region10: #{tpu_custom_call.1} parent=1 // pred_check
      _
    $region11: #{tpu_custom_call.1} parent=1 // pred_check_branch
      %18 = sbr.rel (0) target = $region13
    $region12: #{tpu_custom_call.1} parent=1 // pred_region
      _
    $region13: #{tpu_custom_call.1} parent=1 // pred_fallthru
      _
    // Predicated region
    $region14: #{tpu_custom_call.1} parent=1 // pred_check
      _
    $region15: #{tpu_custom_call.1} parent=1 // pred_check_branch
      %20 = sbr.rel (0) target = $region17
    $region16: #{tpu_custom_call.1} parent=1 // pred_region
      _
    $region17: #{tpu_custom_call.1} parent=1 // pred_fallthru
      _
    // Predicated region
    $region18: #{tpu_custom_call.1} parent=1 // pred_check
      _
    $region19: #{tpu_custom_call.1} parent=1 // pred_check_branch
      %22 = sbr.rel (0) target = $region21
    $region20: #{tpu_custom_call.1} parent=1 // pred_region
      _
    $region21: #{tpu_custom_call.1} parent=1 // pred_fallthru
      _
    // Predicated region
    $region22: #{tpu_custom_call.1} parent=1 // pred_check
      _
    $region23: #{tpu_custom_call.1} parent=1 // pred_check_branch
      %24 = sbr.rel (0) target = $region25
    $region24: #{tpu_custom_call.1} parent=1 // pred_region
      _
    $region25: #{tpu_custom_call.1} parent=1 // pred_fallthru
      _
    // Predicated region
    $region26: #{tpu_custom_call.1} parent=1 // pred_check
      _
    $region27: #{tpu_custom_call.1} parent=1 // pred_check_branch
      %26 = sbr.rel (0) target = $region29
    $region28: #{tpu_custom_call.1} parent=1 // pred_region
      _
    $region29: #{tpu_custom_call.1} parent=1 // pred_fallthru
      _
    %v27 = vld [vmem:[%s0] sm:$0xff]
    %v28 = vld [vmem:[%s0 + $0x8] sm:$0xff]
    %v29 = vld [vmem:[%s1] sm:$0xff]
    %v30 = vld [vmem:[%s1 + $0x8] sm:$0xf]
    %vm31 = vcmask 97280
    %v33 = vsel %vm31, %v27, 0
    %v36 = vsel %vm31, %v28, 0
    %vm38 = vcmask 1043456
    %v40 = vsel %vm38, %v30, 0
    %42 = vmatprep.subr.mxu0 0.0
    %43 = vmatpush1.msra.mxu0 %v29
    %44 = vmatprep.subr.mxu0 0.0
    %45 = vmatpush1.msra.mxu0 %v40
    %46 = vmatprep.subr.mxu0 0.0
    %47 = vmatpush1.msra.mxu0 0.0
    %48 = vmatprep.subr.mxu0 0.0
    %49 = vmatpush1.msra.mxu0 0.0
    %50 = vmatprep.subr.mxu0 0.0
    %51 = vmatpush1.msra.mxu0 0.0
    %52 = vmatprep.subr.mxu0 0.0
    %53 = vmatpush1.msra.mxu0 0.0
    %54 = vmatprep.subr.mxu0 0.0
    %55 = vmatpush1.msra.mxu0 0.0
    %56 = vmatprep.subr.mxu0 0.0
    %57 = vmatpush1.msra.mxu0 0.0
    %58 = vmatprep.subr.mxu0 0.0
    %59 = vmatpush1.msra.mxu0 0.0
    %60 = vmatprep.subr.mxu0 0.0
    %61 = vmatpush1.msra.mxu0 0.0
    %62 = vmatprep.subr.mxu0 0.0
    %63 = vmatpush1.msra.mxu0 0.0
    %64 = vmatprep.subr.mxu0 0.0
    %65 = vmatpush1.msra.mxu0 0.0
    %66 = vmatprep.subr.mxu0 0.0
    %67 = vmatpush1.msra.mxu0 0.0
    %68 = vmatprep.subr.mxu0 0.0
    %69 = vmatpush1.msra.mxu0 0.0
    %70 = vmatprep.subr.mxu0 0.0
    %71 = vmatpush1.msra.mxu0 0.0
    %72 = vmatprep.subr.mxu0 0.0
    %73 = vmatpush1.msra.mxu0 0.0
    %74 = vmatprep.subr.mxu0 0.0
    %75 = vmatpush1.msra.mxu0 0.0
    %76 = vmatprep.subr.mxu0 0.0
    %77 = vmatpush1.msra.mxu0 0.0
    %78 = vmatprep.subr.mxu0 0.0
    %79 = vmatpush1.msra.mxu0 0.0
    %80 = vmatprep.subr.mxu0 0.0
    %81 = vmatpush1.msra.mxu0 0.0
    %82 = vmatprep.subr.mxu0 0.0
    %83 = vmatpush1.msra.mxu0 0.0
    %84 = vmatprep.subr.mxu0 0.0
    %85 = vmatpush1.msra.mxu0 0.0
    %86 = vmatprep.subr.mxu0 0.0
    %87 = vmatpush1.msra.mxu0 0.0
    %88 = vmatprep.subr.mxu0 0.0
    %89 = vmatpush1.msra.mxu0 0.0
    %90 = vmatprep.subr.mxu0 0.0
    %91 = vmatpush1.msra.mxu0 0.0
    %92 = vmatprep.subr.mxu0 0.0
    %93 = vmatpush1.msra.mxu0 0.0
    %94 = vmatprep.subr.mxu0 0.0
    %95 = vmatpush1.msra.mxu0 0.0
    %96 = vmatprep.subr.mxu0 0.0
    %97 = vmatpush1.msra.mxu0 0.0
    %98 = vmatprep.subr.mxu0 0.0
    %99 = vmatpush1.msra.mxu0 0.0
    %100 = vmatprep.subr.mxu0 0.0
    %101 = vmatpush1.msra.mxu0 0.0
    %102 = vmatprep.subr.mxu0 0.0
    %103 = vmatpush1.msra.mxu0 0.0
    %104 = vmatprep.subr.mxu0 0.0
    %105 = vmatpush1.msra.mxu0 0.0
    %106 = vmatprep.mubr.f32.mxu0 0.0
    %107 = vmatmul.mubr.f32.gmra.mrb[0].mxu0 %v33
    %v108 = vpop.f32.mrb[0].mxu0
    %v109 = vadd.f32 0.0, %v108
    %v110 = vpop.f32.mrb[0].mxu0
    %111 = vmatprep.mubr.f32.mxu0 0.0
    %112 = vmatmul.mubr.f32.gmra.mrb[0].mxu0 %v36
    %v113 = vpop.f32.mrb[0].mxu0
    %v114 = vadd.f32 0.0, %v113
    %v115 = vpop.f32.mrb[0].mxu0
    %116 = vdwg.mxu0
    %v117 = vld [vmem:[%s2] sm:$0xff]
    %v118 = vld [vmem:[%s3] sm:$0xff]
    %vm119 = vcmask 261120
    %v120 = vsel %vm119, %v109, 0.0
    %v121 = vsel %vm119, %v114, 0.0
    %v122 = vadd.f32 %v120, %v121
    %123 = vadd.xlane.f32.xlu0 %v122
    %v124 = vpop.xlane.xlu0 %123
    %v125 = vmul.f32 %v109, %v109
    %v126 = vmul.f32 %v114, %v114
    %v127 = vsel %vm119, %v125, 0.0
    %v128 = vsel %vm119, %v126, 0.0
    %v129 = vadd.f32 %v127, %v128
    %130 = vadd.xlane.f32.xlu0 %v129
    %v131 = vpop.xlane.xlu0 %130
    %v132 = vmul.f32 %v124, 0.015625
    %v133 = vmul.f32 %v131, 0.015625
    %v134 = vmul.f32 %v132, %v132
    %v135 = vsub.f32 %v133, %v134
    %v136 = vsub.f32 %v109, %v132
    %v137 = vsub.f32 %v114, %v132
    %v138 = vadd.f32 %v135, 1e-05
    %v139 = vrsqrt.pop %v138
    %v140 = vmul.f32 %v136, %v139
    %v141 = vmul.f32 %v137, %v139
    %143 = vset.pattern.permute.xlu0 0
    %144 = vperm.xlu0 %143, %v117
    %v145 = vpop.permute.xlu0 %144
    %v147 = vmul.f32 %v140, %v145
    %v148 = vmul.f32 %v141, %v145
    %150 = vset.pattern.permute.xlu0 0
    %151 = vperm.xlu0 %150, %v118
    %v152 = vpop.permute.xlu0 %151
    %v154 = vadd.f32 %v147, %v152
    %v155 = vadd.f32 %v148, %v152
    %vm156 = vcmp.ge.f32.partialorder %v154, 0.0
    %vm157 = vcmp.ge.f32.partialorder %v155, 0.0
    %v158 = vmul.f32 %v154, 0.2
    %v159 = vmul.f32 %v155, 0.2
    %v160 = vsel %vm156, %v154, %v158
    %v161 = vsel %vm157, %v155, %v159
    %162 = vst.msk [vmem:[#allocation2] sm:$0xff] %vm119, 0.0
    %vm163 = vcmask 254976
    %164 = vst.msk [vmem:[#allocation2 + $0x8] sm:$0x3] %vm163, 0.0
    %165 = vst.msk [vmem:[#allocation2 + $0x10] sm:$0xff] %vm119, 0.0
    %166 = vst.msk [vmem:[#allocation2 + $0x18] sm:$0x3] %vm163, 0.0
    %167 = vst.msk [vmem:[#allocation2 + $0x1] sm:$0xff] %vm119, %v160
    %168 = vst.msk [vmem:[#allocation2 + $0x11] sm:$0xff] %vm119, %v161
    %v169 = vld [vmem:[#allocation2] sm:$0xff]
    %v170 = vld [vmem:[#allocation2 + $0x10] sm:$0xff]
    %v171 = vld [vmem:[#allocation2 + $0x1] sm:$0xff]
    %v172 = vld [vmem:[#allocation2 + $0x11] sm:$0xff]
    %v173 = vld [vmem:[#allocation2 + $0x2] sm:$0xff]
    %v174 = vld [vmem:[#allocation2 + $0x12] sm:$0xff]
    %177 = vrot.lane.b32.xlu0 %v171, 32
    %v178 = vpop.permute.xlu0 %177
    %179 = vrot.lane.b32.xlu0 %v172, 32
    %v180 = vpop.permute.xlu0 %179
    %185 = vrot.lane.b32.xlu0 %v173, 64
    %v186 = vpop.permute.xlu0 %185
    %187 = vrot.lane.b32.xlu0 %v174, 64
    %v188 = vpop.permute.xlu0 %187
    %v191 = vsel %vm119, %v169, %v178
    %v192 = vsel %vm119, %v170, %v180
    %vm193 = vcmask 523264
    %v194 = vsel %vm193, %v191, %v186
    %v195 = vsel %vm193, %v192, %v188
    %v196 = vld [vmem:[%s4] sm:$0xff]
    %v197 = vld [vmem:[%s4 + $0x8] sm:$0xff]
    %v198 = vld [vmem:[%s4 + $0x10] sm:$0xff]
    %v199 = vld [vmem:[%s4 + $0x18] sm:$0xff]
    %v200 = vld [vmem:[%s4 + $0x20] sm:$0xff]
    %v201 = vld [vmem:[%s4 + $0x28] sm:$0xff]
    %v202 = vld [vmem:[%s4 + $0x30] sm:$0xff]
    %v203 = vld [vmem:[%s4 + $0x38] sm:$0xff]
    %v204 = vld [vmem:[%s4 + $0x40] sm:$0xff]
    %v205 = vld [vmem:[%s4 + $0x48] sm:$0xff]
    %v206 = vld [vmem:[%s4 + $0x50] sm:$0xff]
    %v207 = vld [vmem:[%s4 + $0x58] sm:$0xff]
    %vm208 = vcmask 785408
    %v210 = vsel %vm208, %v194, 0
    %v213 = vsel %vm208, %v195, 0
    %215 = vmatprep.subr.mxu0 0.0
    %216 = vmatpush1.msra.mxu0 %v196
    %217 = vmatprep.subr.mxu0 0.0
    %218 = vmatpush1.msra.mxu0 %v197
    %219 = vmatprep.subr.mxu0 0.0
    %220 = vmatpush1.msra.mxu0 %v198
    %221 = vmatprep.subr.mxu0 0.0
    %222 = vmatpush1.msra.mxu0 %v199
    %223 = vmatprep.subr.mxu0 0.0
    %224 = vmatpush1.msra.mxu0 %v200
    %225 = vmatprep.subr.mxu0 0.0
    %226 = vmatpush1.msra.mxu0 %v201
    %227 = vmatprep.subr.mxu0 0.0
    %228 = vmatpush1.msra.mxu0 %v202
    %229 = vmatprep.subr.mxu0 0.0
    %230 = vmatpush1.msra.mxu0 %v203
    %231 = vmatprep.subr.mxu0 0.0
    %232 = vmatpush1.msra.mxu0 %v204
    %233 = vmatprep.subr.mxu0 0.0
    %234 = vmatpush1.msra.mxu0 %v205
    %235 = vmatprep.subr.mxu0 0.0
    %236 = vmatpush1.msra.mxu0 %v206
    %237 = vmatprep.subr.mxu0 0.0
    %238 = vmatpush1.msra.mxu0 %v207
    %239 = vmatprep.subr.mxu0 0.0
    %240 = vmatpush1.msra.mxu0 0.0
    %241 = vmatprep.subr.mxu0 0.0
    %242 = vmatpush1.msra.mxu0 0.0
    %243 = vmatprep.subr.mxu0 0.0
    %244 = vmatpush1.msra.mxu0 0.0
    %245 = vmatprep.subr.mxu0 0.0
    %246 = vmatpush1.msra.mxu0 0.0
    %247 = vmatprep.subr.mxu0 0.0
    %248 = vmatpush1.msra.mxu0 0.0
    %249 = vmatprep.subr.mxu0 0.0
    %250 = vmatpush1.msra.mxu0 0.0
    %251 = vmatprep.subr.mxu0 0.0
    %252 = vmatpush1.msra.mxu0 0.0
    %253 = vmatprep.subr.mxu0 0.0
    %254 = vmatpush1.msra.mxu0 0.0
    %255 = vmatprep.subr.mxu0 0.0
    %256 = vmatpush1.msra.mxu0 0.0
    %257 = vmatprep.subr.mxu0 0.0
    %258 = vmatpush1.msra.mxu0 0.0
    %259 = vmatprep.subr.mxu0 0.0
    %260 = vmatpush1.msra.mxu0 0.0
    %261 = vmatprep.subr.mxu0 0.0
    %262 = vmatpush1.msra.mxu0 0.0
    %263 = vmatprep.subr.mxu0 0.0
    %264 = vmatpush1.msra.mxu0 0.0
    %265 = vmatprep.subr.mxu0 0.0
    %266 = vmatpush1.msra.mxu0 0.0
    %267 = vmatprep.subr.mxu0 0.0
    %268 = vmatpush1.msra.mxu0 0.0
    %269 = vmatprep.subr.mxu0 0.0
    %270 = vmatpush1.msra.mxu0 0.0
    %271 = vmatprep.subr.mxu0 0.0
    %272 = vmatpush1.msra.mxu0 0.0
    %273 = vmatprep.subr.mxu0 0.0
    %274 = vmatpush1.msra.mxu0 0.0
    %275 = vmatprep.subr.mxu0 0.0
    %276 = vmatpush1.msra.mxu0 0.0
    %277 = vmatprep.subr.mxu0 0.0
    %278 = vmatpush1.msra.mxu0 0.0
    %279 = vmatprep.mubr.f32.mxu0 0.0
    %280 = vmatmul.mubr.f32.gmra.mrb[0].mxu0 %v210
    %v281 = vpop.f32.mrb[0].mxu0
    %v282 = vadd.f32 0.0, %v281
    %v283 = vpop.f32.mrb[0].mxu0
    %284 = vmatprep.mubr.f32.mxu0 0.0
    %285 = vmatmul.mubr.f32.gmra.mrb[0].mxu0 %v213
    %v286 = vpop.f32.mrb[0].mxu0
    %v287 = vadd.f32 0.0, %v286
    %v288 = vpop.f32.mrb[0].mxu0
    %289 = vdwg.mxu0
    %v290 = vld [vmem:[%s5] sm:$0xff]
    %v291 = vld [vmem:[%s6] sm:$0xff]
    %v292 = vsel %vm119, %v282, 0.0
    %v293 = vsel %vm119, %v287, 0.0
    %v294 = vadd.f32 %v292, %v293
    %295 = vadd.xlane.f32.xlu0 %v294
    %v296 = vpop.xlane.xlu0 %295
    %v297 = vmul.f32 %v282, %v282
    %v298 = vmul.f32 %v287, %v287
    %v299 = vsel %vm119, %v297, 0.0
    %v300 = vsel %vm119, %v298, 0.0
    %v301 = vadd.f32 %v299, %v300
    %302 = vadd.xlane.f32.xlu0 %v301
    %v303 = vpop.xlane.xlu0 %302
    %v304 = vmul.f32 %v296, 0.015625
    %v305 = vmul.f32 %v303, 0.015625
    %v306 = vmul.f32 %v304, %v304
    %v307 = vsub.f32 %v305, %v306
    %v308 = vsub.f32 %v282, %v304
    %v309 = vsub.f32 %v287, %v304
    %v310 = vadd.f32 %v307, 1e-05
    %v311 = vrsqrt.pop %v310
    %v312 = vmul.f32 %v308, %v311
    %v313 = vmul.f32 %v309, %v311
    %315 = vset.pattern.permute.xlu0 0
    %316 = vperm.xlu0 %315, %v290
    %v317 = vpop.permute.xlu0 %316
    %v319 = vmul.f32 %v312, %v317
    %v320 = vmul.f32 %v313, %v317
    %322 = vset.pattern.permute.xlu0 0
    %323 = vperm.xlu0 %322, %v291
    %v324 = vpop.permute.xlu0 %323
    %v326 = vadd.f32 %v319, %v324
    %v327 = vadd.f32 %v320, %v324
    %vm328 = vcmp.ge.f32.partialorder %v326, 0.0
    %vm329 = vcmp.ge.f32.partialorder %v327, 0.0
    %v330 = vmul.f32 %v326, 0.2
    %v331 = vmul.f32 %v327, 0.2
    %v332 = vsel %vm328, %v326, %v330
    %v333 = vsel %vm329, %v327, %v331
    %v336 = vrot.slane %v333, 7
    %vm337 = vcmask 1041409
    %v338 = vsel %vm337, %v336, %v332
    %v340 = vrot.slane %v332, 1
    %v341 = vsel %vm337, %v333, %v340
    %342 = vrot.lane.b32.xlu0 %v341, 32
    %v343 = vpop.permute.xlu0 %342
    %v345 = vrot.slane %v332, 2
    %v346 = vrot.slane %v333, 1
    %v347 = vsel %vm337, %v346, %v345
    %348 = vrot.lane.b32.xlu0 %v347, 64
    %v349 = vpop.permute.xlu0 %348
    %v351 = vrot.slane %v332, 3
    %v352 = vrot.slane %v333, 2
    %v353 = vsel %vm337, %v352, %v351
    %354 = vrot.lane.b32.xlu0 %v353, 96
    %v355 = vpop.permute.xlu0 %354
    %v357 = vrot.slane %v332, 4
    %v358 = vrot.slane %v333, 3
    %v359 = vsel %vm337, %v358, %v357
    %v361 = vrot.slane %v332, 5
    %v362 = vrot.slane %v333, 4
    %v363 = vsel %vm337, %v362, %v361
    %364 = vrot.lane.b32.xlu0 %v363, 32
    %v365 = vpop.permute.xlu0 %364
    %v367 = vrot.slane %v332, 6
    %v368 = vrot.slane %v333, 5
    %v369 = vsel %vm337, %v368, %v367
    %370 = vrot.lane.b32.xlu0 %v369, 64
    %v371 = vpop.permute.xlu0 %370
    %v373 = vrot.slane %v332, 7
    %v374 = vrot.slane %v333, 6
    %v375 = vsel %vm337, %v374, %v373
    %376 = vrot.lane.b32.xlu0 %v375, 96
    %v377 = vpop.permute.xlu0 %376
    %v379 = vsel %vm119, %v338, %v343
    %v380 = vsel %vm193, %v379, %v349
    %v381 = vsel %vm208, %v380, %v355
    %v382 = vsel %vm119, %v359, %v365
    %v383 = vsel %vm193, %v382, %v371
    %v384 = vsel %vm208, %v383, %v377
    %v387 = vcombine.low %v381, %v384
    %v389 = vunpack.c.l.s4 1983009808
    %v390 = vunpack.c.0.s8 %v389
    %v391 = vlaneseq
    %v392 = vshrl.u32 %v391, 7
    %v393 = vsub.s32 %v390, %v392
    %v394 = vrot.slane %v387, %v393
    %396 = vst [vmem:[#allocation3] sm:$0xf] %v394
    // Predicated region
    $region30: #{tpu_custom_call.1} parent=1 // pred_check
      _
    $region31: #{tpu_custom_call.1} parent=1 // pred_check_branch
      %398 = sbr.rel (0) target = $region33
    $region32: #{tpu_custom_call.1} parent=1 // pred_region
      %s400 = ssub.s32 64, 64
      %401 = vsyncadd [#allocation4], %s400
      %s403 = sshll.u32 [#allocation3], 4
      %s404 = int_to_ptr.vmem [resolvable:$true] %s403
      %406 = dma.vmem_to_hbm [thread:$0]  %s404, 64, %s7, [#allocation4]
    $region33: #{tpu_custom_call.1} parent=1 // pred_fallthru
      _
    // Predicated region
    $region34: #{tpu_custom_call.1} parent=1 // pred_check
      _
    $region35: #{tpu_custom_call.1} parent=1 // pred_check_branch
      %408 = sbr.rel (0) target = $region37
    $region36: #{tpu_custom_call.1} parent=1 // pred_region
      %409 = dma.done [#allocation4], 64
    $region37: #{tpu_custom_call.1} parent=1 // pred_fallthru
      _
    %410 = vsyncpa [#allocation4], 1

</llo_original>
